<compile_context>
chip_gen: v7x
topology: tpu7x:2x2x1
jax: 0.10.0
libtpu: 0.0.40
codegen_flags: <defaults>
</compile_context>

<pallas_src>
import functools

import jax
import jax.numpy as jnp
from jax.experimental import pallas as pl
from jax.experimental.pallas import tpu as pltpu


def _mlp2d_kernel(x_ref, w1_ref, b1_ref, w2_ref, b2_ref, w3_ref, b3_ref, o_ref):
    # fc1 + ReLU   (dropout(p=0) is identity -> omitted)
    x = x_ref[...]
    h = jnp.dot(x, w1_ref[...], preferred_element_type=jnp.float32) + b1_ref[...]
    h = jnp.maximum(h, 0.0)
    # fc2 + ReLU
    h = jnp.dot(h, w2_ref[...], preferred_element_type=jnp.float32) + b2_ref[...]
    h = jnp.maximum(h, 0.0)
    # fc3 (N = out_dim un-padded; Mosaic handles MXU-internal padding)
    z = jnp.dot(h, w3_ref[...], preferred_element_type=jnp.float32) + b3_ref[...]
    # softmax over dim=1 -- exact division for strict parity with torch.softmax
    z = z - jnp.max(z, axis=-1, keepdims=True)
    e = jnp.exp(z)
    o_ref[...] = (e / jnp.sum(e, axis=-1, keepdims=True)).astype(o_ref.dtype)


def mlp_2d_forward(x_nchw, params, *, tb=2048):
    """x_nchw: (B, C, 7, 7) float32. params: dict of (in,out) weights / (1,out) biases."""
    B = x_nchw.shape[0]
    x2d = x_nchw.reshape(B, -1)            # same flattening as torch .view(B, -1)
    D = x2d.shape[1]                       # = C * 7 * 7 (e.g. 196)

    w1, b1, w2, b2, w3, b3 = (
        params["w1"], params["b1"], params["w2"],
        params["b2"], params["w3"], params["b3"],
    )
    hidden = w1.shape[1]
    out_dim = w3.shape[1]

    # Lane-pad the hidden dim once (weights only, tiny): intermediates become
    # lane-dense; zero columns/rows are neutral through ReLU and fc3.
    HP = int(pl.cdiv(hidden, 128)) * 128
    w1_p = jnp.zeros((D, HP), w1.dtype).at[:, :hidden].set(w1)
    b1_p = jnp.zeros((1, HP), b1.dtype).at[:, :hidden].set(b1)
    w2_p = jnp.zeros((HP, HP), w2.dtype).at[:hidden, :hidden].set(w2)
    b2_p = jnp.zeros((1, HP), b2.dtype).at[:, :hidden].set(b2)
    w3_p = jnp.zeros((HP, out_dim), w3.dtype).at[:hidden, :].set(w3)
    # b3 stays (1, out_dim); output is written un-padded.

    # Batch tile: full B when it fits in one tile (block == full dim, always
    # legal); otherwise a multiple of 8.  Partial last tile is masked by Pallas.
    if B <= tb:
        TB = B
        grid = (1,)
    else:
        TB = max(8, (int(tb) // 8) * 8)
        grid = (int(pl.cdiv(B, TB)),)

    x_map = lambda i: (i, 0)
    const = lambda i: (0, 0)               # weights/biases resident across grid steps

    weight_bytes = 4 * (w1_p.size + b1_p.size + w2_p.size + b2_p.size
                        + w3_p.size + b3.size)
    cost = pl.CostEstimate(
        flops=2 * B * (D * HP + HP * HP + HP * out_dim),
        transcendentals=B * out_dim,                           # exp
        bytes_accessed=4 * (B * D + B * out_dim) + weight_bytes,
    )

    out = pl.pallas_call(
        _mlp2d_kernel,
        out_shape=jax.ShapeDtypeStruct((B, out_dim), jnp.float32),
        grid=grid,
        in_specs=[
            pl.BlockSpec((TB, D), x_map),                      # x tile (pipelined)
            pl.BlockSpec((D, HP), const),                      # w1 (resident)
            pl.BlockSpec((1, HP), const),                      # b1
            pl.BlockSpec((HP, HP), const),                     # w2
            pl.BlockSpec((1, HP), const),                      # b2
            pl.BlockSpec((HP, out_dim), const),                # w3
            pl.BlockSpec((1, out_dim), const),                 # b3
        ],
        out_specs=pl.BlockSpec((TB, out_dim), x_map),
        compiler_params=pltpu.CompilerParams(
            dimension_semantics=("parallel",),                 # megacore on v7x
            vmem_limit_bytes=32 * 1024 * 1024,                 # headroom for large TB (v5e default is 16 MiB)
        ),
        cost_estimate=cost,
    )(x2d, w1_p, b1_p, w2_p, b2_p, w3_p, b3)

    return out


def init_params(key, input_dim, output_dim, hidden_dim=0, width=7):
    """Deterministic init mirroring nn.Linear default (U[-1/sqrt(fan_in), +])."""
    if hidden_dim == 0:
        hidden_dim = input_dim // 4
    in_dim = input_dim * width * width

    def linear(key, fan_in, fan_out):
        kw, kb = jax.random.split(key)
        bound = 1.0 / jnp.sqrt(fan_in)
        # stored as (in, out) so kernel does x @ W
        w = jax.random.uniform(kw, (fan_in, fan_out), jnp.float32, -bound, bound)
        b = jax.random.uniform(kb, (1, fan_out), jnp.float32, -bound, bound)
        return w, b

    k1, k2, k3 = jax.random.split(key, 3)
    w1, b1 = linear(k1, in_dim, hidden_dim)
    w2, b2 = linear(k2, hidden_dim, hidden_dim)
    w3, b3 = linear(k3, hidden_dim, output_dim)
    return {"w1": w1, "b1": b1, "w2": w2, "b2": b2, "w3": w3, "b3": b3}


def _reference(x_nchw, params):
    x2d = x_nchw.reshape(x_nchw.shape[0], -1)
    h = jnp.maximum(x2d @ params["w1"] + params["b1"], 0.0)
    h = jnp.maximum(h @ params["w2"] + params["b2"], 0.0)
    z = h @ params["w3"] + params["b3"]
    return jax.nn.softmax(z, axis=1)


if __name__ == "__main__":
    key = jax.random.PRNGKey(0)
    kx, kp, kx2 = jax.random.split(key, 3)

    B, C, W = 2, 4, 7          # module hard-codes width=7 spatial
    input_dim, output_dim, hidden_dim = C, 8, 32

    params = init_params(kp, input_dim, output_dim, hidden_dim=hidden_dim, width=W)

    # --- small batch (single tile) ---
    x = jax.random.normal(kx, (B, C, W, W), dtype=jnp.float32)
    out = jax.block_until_ready(mlp_2d_forward(x, params))
    assert out.shape == (B, output_dim)
    row_sums = jnp.sum(out, axis=1)
    assert bool(jnp.all(jnp.abs(row_sums - 1.0) < 1e-4)), "softmax rows must sum to 1"
    ref = _reference(x, params)
    assert bool(jnp.all(jnp.abs(out - ref) < 1e-4)), "mismatch vs. reference"

    # --- multi-tile batch with a partial last tile (exercises the grid path) ---
    B2 = 19
    x2 = jax.random.normal(kx2, (B2, C, W, W), dtype=jnp.float32)
    out2 = jax.block_until_ready(mlp_2d_forward(x2, params, tb=8))
    assert out2.shape == (B2, output_dim)
    ref2 = _reference(x2, params)
    assert bool(jnp.all(jnp.abs(out2 - ref2) < 1e-4)), "mismatch vs. reference (tiled)"

    print("KERNEL_OK")
</pallas_src>

<mosaic_0001>
module attributes {stable_mosaic.version = 11 : i64} {
  func.func @_mlp2d_kernel(%arg0: i32, %arg1: memref<2x196xf32, #tpu.memory_space<vmem>>, %arg2: memref<196x128xf32, #tpu.memory_space<vmem>>, %arg3: memref<1x128xf32, #tpu.memory_space<vmem>>, %arg4: memref<128x128xf32, #tpu.memory_space<vmem>>, %arg5: memref<1x128xf32, #tpu.memory_space<vmem>>, %arg6: memref<128x8xf32, #tpu.memory_space<vmem>>, %arg7: memref<1x8xf32, #tpu.memory_space<vmem>>, %arg8: memref<2x8xf32, #tpu.memory_space<vmem>>) attributes {dimension_semantics = [#tpu.dimension_semantics<parallel>], iteration_bounds = array<i64: 1>, scalar_prefetch = 0 : i64, scratch_operands = 0 : i64, tpu.core_type = #tpu.core_type<tc>, window_params = [{transform_indices = @transform_0, window_bounds = array<i64: 2, 196>}, {pipeline_mode = #tpu.pipeline_mode<synchronous>, transform_indices = @transform_1, window_bounds = array<i64: 196, 128>}, {pipeline_mode = #tpu.pipeline_mode<synchronous>, transform_indices = @transform_2, window_bounds = array<i64: 1, 128>}, {pipeline_mode = #tpu.pipeline_mode<synchronous>, transform_indices = @transform_3, window_bounds = array<i64: 128, 128>}, {pipeline_mode = #tpu.pipeline_mode<synchronous>, transform_indices = @transform_4, window_bounds = array<i64: 1, 128>}, {pipeline_mode = #tpu.pipeline_mode<synchronous>, transform_indices = @transform_5, window_bounds = array<i64: 128, 8>}, {pipeline_mode = #tpu.pipeline_mode<synchronous>, transform_indices = @transform_6, window_bounds = array<i64: 1, 8>}, {transform_indices = @transform_7, window_bounds = array<i64: 2, 8>}]} {
    %c0 = arith.constant 0 : index
    %c0_0 = arith.constant 0 : index
    %0 = vector.load %arg1[%c0, %c0_0] : memref<2x196xf32, #tpu.memory_space<vmem>>, vector<2x196xf32>
    %c0_1 = arith.constant 0 : index
    %c0_2 = arith.constant 0 : index
    %1 = vector.load %arg2[%c0_1, %c0_2] : memref<196x128xf32, #tpu.memory_space<vmem>>, vector<196x128xf32>
    %cst = arith.constant dense<0.000000e+00> : vector<2x128xf32>
    %2 = tpu.matmul %0, %1, %cst {dimension_numbers = #tpu.dot_dimension_numbers<[1], [0], [0], [1], [0, 0, 1, 1], [], []>} : vector<2x196xf32>, vector<196x128xf32>, vector<2x128xf32> -> vector<2x128xf32>
    %c0_3 = arith.constant 0 : index
    %c0_4 = arith.constant 0 : index
    %3 = vector.load %arg3[%c0_3, %c0_4] : memref<1x128xf32, #tpu.memory_space<vmem>>, vector<1x128xf32>
    %4 = vector.broadcast %3 : vector<1x128xf32> to vector<2x128xf32>
    %5 = arith.addf %2, %4 : vector<2x128xf32>
    %cst_5 = arith.constant 0.000000e+00 : f32
    %6 = vector.broadcast %cst_5 : f32 to vector<2x128xf32>
    %7 = arith.maximumf %5, %6 : vector<2x128xf32>
    %c0_6 = arith.constant 0 : index
    %c0_7 = arith.constant 0 : index
    %8 = vector.load %arg4[%c0_6, %c0_7] : memref<128x128xf32, #tpu.memory_space<vmem>>, vector<128x128xf32>
    %cst_8 = arith.constant dense<0.000000e+00> : vector<2x128xf32>
    %9 = tpu.matmul %7, %8, %cst_8 {dimension_numbers = #tpu.dot_dimension_numbers<[1], [0], [0], [1], [0, 0, 1, 1], [], []>} : vector<2x128xf32>, vector<128x128xf32>, vector<2x128xf32> -> vector<2x128xf32>
    %c0_9 = arith.constant 0 : index
    %c0_10 = arith.constant 0 : index
    %10 = vector.load %arg5[%c0_9, %c0_10] : memref<1x128xf32, #tpu.memory_space<vmem>>, vector<1x128xf32>
    %11 = vector.broadcast %10 : vector<1x128xf32> to vector<2x128xf32>
    %12 = arith.addf %9, %11 : vector<2x128xf32>
    %cst_11 = arith.constant 0.000000e+00 : f32
    %13 = vector.broadcast %cst_11 : f32 to vector<2x128xf32>
    %14 = arith.maximumf %12, %13 : vector<2x128xf32>
    %c0_12 = arith.constant 0 : index
    %c0_13 = arith.constant 0 : index
    %15 = vector.load %arg6[%c0_12, %c0_13] : memref<128x8xf32, #tpu.memory_space<vmem>>, vector<128x8xf32>
    %cst_14 = arith.constant dense<0.000000e+00> : vector<2x8xf32>
    %16 = tpu.matmul %14, %15, %cst_14 {dimension_numbers = #tpu.dot_dimension_numbers<[1], [0], [0], [1], [0, 0, 1, 1], [], []>} : vector<2x128xf32>, vector<128x8xf32>, vector<2x8xf32> -> vector<2x8xf32>
    %c0_15 = arith.constant 0 : index
    %c0_16 = arith.constant 0 : index
    %17 = vector.load %arg7[%c0_15, %c0_16] : memref<1x8xf32, #tpu.memory_space<vmem>>, vector<1x8xf32>
    %18 = vector.broadcast %17 : vector<1x8xf32> to vector<2x8xf32>
    %19 = arith.addf %16, %18 : vector<2x8xf32>
    %cst_17 = arith.constant dense<0xFF800000> : vector<2xf32>
    %20 = vector.multi_reduction <maximumf>, %19, %cst_17 [1] : vector<2x8xf32> to vector<2xf32>
    %21 = vector.shape_cast %20 : vector<2xf32> to vector<2x1xf32>
    %22 = vector.broadcast %21 : vector<2x1xf32> to vector<2x8xf32>
    %23 = arith.subf %19, %22 : vector<2x8xf32>
    %24 = math.exp %23 : vector<2x8xf32>
    %cst_18 = arith.constant dense<0.000000e+00> : vector<2xf32>
    %25 = vector.multi_reduction <add>, %24, %cst_18 [1] : vector<2x8xf32> to vector<2xf32>
    %26 = vector.shape_cast %25 : vector<2xf32> to vector<2x1xf32>
    %27 = vector.broadcast %26 : vector<2x1xf32> to vector<2x8xf32>
    %28 = arith.divf %24, %27 : vector<2x8xf32>
    %c0_19 = arith.constant 0 : index
    %c0_20 = arith.constant 0 : index
    %29 = vector.load %arg8[%c0_19, %c0_20] : memref<2x8xf32, #tpu.memory_space<vmem>>, vector<2x8xf32>
    tpu.vector_store %arg8[%c0_19, %c0_20], %28 {strides = array<i32>} : memref<2x8xf32, #tpu.memory_space<vmem>>, vector<2x8xf32>,
    return
  }
  func.func @transform_0(%arg0: i32) -> (i32, i32) {
    %c0_i32 = arith.constant 0 : i32
    %c0_i32_0 = arith.constant 0 : i32
    return %arg0, %c0_i32 : i32, i32
  }
  func.func @transform_1(%arg0: i32) -> (i32, i32) {
    %c0_i32 = arith.constant 0 : i32
    %c0_i32_0 = arith.constant 0 : i32
    %c0_i32_1 = arith.constant 0 : i32
    return %c0_i32, %c0_i32_0 : i32, i32
  }
  func.func @transform_2(%arg0: i32) -> (i32, i32) {
    %c0_i32 = arith.constant 0 : i32
    %c0_i32_0 = arith.constant 0 : i32
    %c0_i32_1 = arith.constant 0 : i32
    return %c0_i32, %c0_i32_0 : i32, i32
  }
  func.func @transform_3(%arg0: i32) -> (i32, i32) {
    %c0_i32 = arith.constant 0 : i32
    %c0_i32_0 = arith.constant 0 : i32
    %c0_i32_1 = arith.constant 0 : i32
    return %c0_i32, %c0_i32_0 : i32, i32
  }
  func.func @transform_4(%arg0: i32) -> (i32, i32) {
    %c0_i32 = arith.constant 0 : i32
    %c0_i32_0 = arith.constant 0 : i32
    %c0_i32_1 = arith.constant 0 : i32
    return %c0_i32, %c0_i32_0 : i32, i32
  }
  func.func @transform_5(%arg0: i32) -> (i32, i32) {
    %c0_i32 = arith.constant 0 : i32
    %c0_i32_0 = arith.constant 0 : i32
    %c0_i32_1 = arith.constant 0 : i32
    return %c0_i32, %c0_i32_0 : i32, i32
  }
  func.func @transform_6(%arg0: i32) -> (i32, i32) {
    %c0_i32 = arith.constant 0 : i32
    %c0_i32_0 = arith.constant 0 : i32
    %c0_i32_1 = arith.constant 0 : i32
    return %c0_i32, %c0_i32_0 : i32, i32
  }
  func.func @transform_7(%arg0: i32) -> (i32, i32) {
    %c0_i32 = arith.constant 0 : i32
    %c0_i32_0 = arith.constant 0 : i32
    return %arg0, %c0_i32 : i32, i32
  }
}

</mosaic_0001>

<llo_original>
// kernel: tpu_custom_call.1
$region0: #{tpu_custom_call.1}
  #allocation0 [shape = 'u32[]', space=smem, size = 0x4, offset = 0x4, fixed_abs, tag = 'smem constant byte address 0x4 - core index']
  #allocation1 [shape = 'u32[144,128]{1,0:T(1,128)}', space=vmem, size = 0x12000, scoped, tag = 'internal scratch']
  %s0 = inlined_call_operand.vmem [shape: f32[2,196], index: 0, kind: input, shape index: {}]
  %s1 = inlined_call_operand.hbm [shape: f32[196,128], index: 1, kind: input, shape index: {}]
  %s2 = inlined_call_operand.vmem [shape: f32[1,128], index: 2, kind: input, shape index: {}]
  %s3 = inlined_call_operand.vmem [shape: f32[128,128], index: 3, kind: input, shape index: {}]
  %s4 = inlined_call_operand.vmem [shape: f32[1,128], index: 4, kind: input, shape index: {}]
  %s5 = inlined_call_operand.vmem [shape: f32[128,8], index: 5, kind: input, shape index: {}]
  %s6 = inlined_call_operand.vmem [shape: f32[1,8], index: 6, kind: input, shape index: {}]
  %s7 = inlined_call_operand.hbm [shape: f32[2,8], index: 7, kind: output, shape index: {}]
  %s8 = sld [smem:[#allocation0]]
  $region42: #{tpu_custom_call.1} parent=0
    _
  %s10 = ssub.s32 1, %s8
  %s11 = scalar_select 0, %s10, %s8
  $region1: #{tpu_custom_call.1} parent=0
    #allocation2 [shape = 'u8[102400]{0}', space=vmem, size = 0x19000, scoped, tag = 'input window, operand 1, single buffered']
    #allocation3 [shape = 's32[1]{0}', space=sflag, size = 0x4, scoped, tag = 'scoped memory for tpu_custom_call.1']
    #allocation4 [shape = 's32[1]{0}', space=sflag, size = 0x4, scoped, tag = 'scoped memory for tpu_custom_call.1']
    #allocation5 [shape = 'u8[1024]{0}', space=vmem, size = 0x400, scoped, tag = 'output window, operand 0, single buffered']
    %12 = vsyncpa [#allocation3], 0
    %13 = vsyncpa [#allocation4], 0
    // Predicated region
    $region2: #{tpu_custom_call.1} parent=1 // pred_check
      _
    $region3: #{tpu_custom_call.1} parent=1 // pred_check_branch
      %15 = sbr.rel (0) target = $region5
    $region4: #{tpu_custom_call.1} parent=1 // pred_region
      _
    $region5: #{tpu_custom_call.1} parent=1 // pred_fallthru
      _
    // Predicated region
    $region6: #{tpu_custom_call.1} parent=1 // pred_check
      _
    $region7: #{tpu_custom_call.1} parent=1 // pred_check_branch
      %17 = sbr.rel (0) target = $region9
    $region8: #{tpu_custom_call.1} parent=1 // pred_region
      %s19 = ssub.s32 3200, 3200
      %20 = vsyncadd [#allocation3], %s19
      %s21 = sshll.u32 [#allocation2], 4
      %s22 = int_to_ptr.vmem [resolvable:$true] %s21
      %27 = dma.hbm_to_vmem [thread:$0]  %s1, 3200, %s22, [#allocation3], 128, 128, 8
    $region9: #{tpu_custom_call.1} parent=1 // pred_fallthru
      _
    // Predicated region
    $region10: #{tpu_custom_call.1} parent=1 // pred_check
      _
    $region11: #{tpu_custom_call.1} parent=1 // pred_check_branch
      %29 = sbr.rel (0) target = $region13
    $region12: #{tpu_custom_call.1} parent=1 // pred_region
      _
    $region13: #{tpu_custom_call.1} parent=1 // pred_fallthru
      _
    // Predicated region
    $region14: #{tpu_custom_call.1} parent=1 // pred_check
      _
    $region15: #{tpu_custom_call.1} parent=1 // pred_check_branch
      %31 = sbr.rel (0) target = $region17
    $region16: #{tpu_custom_call.1} parent=1 // pred_region
      _
    $region17: #{tpu_custom_call.1} parent=1 // pred_fallthru
      _
    // Predicated region
    $region18: #{tpu_custom_call.1} parent=1 // pred_check
      _
    $region19: #{tpu_custom_call.1} parent=1 // pred_check_branch
      %33 = sbr.rel (0) target = $region21
    $region20: #{tpu_custom_call.1} parent=1 // pred_region
      _
    $region21: #{tpu_custom_call.1} parent=1 // pred_fallthru
      _
    // Predicated region
    $region22: #{tpu_custom_call.1} parent=1 // pred_check
      _
    $region23: #{tpu_custom_call.1} parent=1 // pred_check_branch
      %35 = sbr.rel (0) target = $region25
    $region24: #{tpu_custom_call.1} parent=1 // pred_region
      _
    $region25: #{tpu_custom_call.1} parent=1 // pred_fallthru
      _
    // Predicated region
    $region26: #{tpu_custom_call.1} parent=1 // pred_check
      _
    $region27: #{tpu_custom_call.1} parent=1 // pred_check_branch
      %37 = sbr.rel (0) target = $region29
    $region28: #{tpu_custom_call.1} parent=1 // pred_region
      _
    $region29: #{tpu_custom_call.1} parent=1 // pred_fallthru
      _
    // Predicated region
    $region30: #{tpu_custom_call.1} parent=1 // pred_check
      _
    $region31: #{tpu_custom_call.1} parent=1 // pred_check_branch
      %39 = sbr.rel (0) target = $region33
    $region32: #{tpu_custom_call.1} parent=1 // pred_region
      %40 = dma.done [#allocation3], 3200
    $region33: #{tpu_custom_call.1} parent=1 // pred_fallthru
      _
    %v41 = vld [vmem:[%s0] sm:$0xf]
    %v42 = vld [vmem:[#allocation2] sm:$0xff]
    %v43 = vld [vmem:[#allocation2 + $0x8] sm:$0xff]
    %v44 = vld [vmem:[#allocation2 + $0x10] sm:$0xff]
    %v45 = vld [vmem:[#allocation2 + $0x18] sm:$0xff]
    %v46 = vld [vmem:[#allocation2 + $0x20] sm:$0xff]
    %v47 = vld [vmem:[#allocation2 + $0x28] sm:$0xff]
    %v48 = vld [vmem:[#allocation2 + $0x30] sm:$0xff]
    %v49 = vld [vmem:[#allocation2 + $0x38] sm:$0xff]
    %v50 = vld [vmem:[#allocation2 + $0x40] sm:$0xff]
    %v51 = vld [vmem:[#allocation2 + $0x48] sm:$0xff]
    %v52 = vld [vmem:[#allocation2 + $0x50] sm:$0xff]
    %v53 = vld [vmem:[#allocation2 + $0x58] sm:$0xff]
    %v54 = vld [vmem:[#allocation2 + $0x60] sm:$0xff]
    %v55 = vld [vmem:[#allocation2 + $0x68] sm:$0xff]
    %v56 = vld [vmem:[#allocation2 + $0x70] sm:$0xff]
    %v57 = vld [vmem:[#allocation2 + $0x78] sm:$0xff]
    %v58 = vld [vmem:[#allocation2 + $0x80] sm:$0xff]
    %v59 = vld [vmem:[#allocation2 + $0x88] sm:$0xff]
    %v60 = vld [vmem:[#allocation2 + $0x90] sm:$0xff]
    %v61 = vld [vmem:[#allocation2 + $0x98] sm:$0xff]
    %v62 = vld [vmem:[#allocation2 + $0xa0] sm:$0xff]
    %v63 = vld [vmem:[#allocation2 + $0xa8] sm:$0xff]
    %v64 = vld [vmem:[#allocation2 + $0xb0] sm:$0xff]
    %v65 = vld [vmem:[#allocation2 + $0xb8] sm:$0xff]
    %v66 = vld [vmem:[#allocation2 + $0xc0] sm:$0xf]
    %v67 = vld [vmem:[%s2] sm:$0x1]
    %v69 = vlaneseq
    %v70 = vshrl.u32 %v69, 7
    %v71 = vsub.s32 0, %v70
    %v72 = vrot.slane %v67, %v71
    %v76 = vunpack.c.l.s4 1983009808
    %v77 = vunpack.c.0.s8 %v76
    %v78 = vlaneseq
    %v79 = vshrl.u32 %v78, 7
    %v80 = vsub.s32 %v77, %v79
    %v81 = vrot.slane %v41, %v80
    %v82 = vcombine.high %v81, %v81
    %vm84 = vcmask 556032
    %v85 = vsel %vm84, %v82, 0
    %vm87 = vcmask 1043456
    %v89 = vsel %vm87, %v66, 0
    %91 = vmatprep.subr.mxu0 0.0
    %92 = vmatpush1.msra.mxu0 %v42
    %93 = vmatprep.subr.mxu0 0.0
    %94 = vmatpush1.msra.mxu0 %v43
    %95 = vmatprep.subr.mxu0 0.0
    %96 = vmatpush1.msra.mxu0 %v44
    %97 = vmatprep.subr.mxu0 0.0
    %98 = vmatpush1.msra.mxu0 %v45
    %99 = vmatprep.subr.mxu0 0.0
    %100 = vmatpush1.msra.mxu0 %v46
    %101 = vmatprep.subr.mxu0 0.0
    %102 = vmatpush1.msra.mxu0 %v47
    %103 = vmatprep.subr.mxu0 0.0
    %104 = vmatpush1.msra.mxu0 %v48
    %105 = vmatprep.subr.mxu0 0.0
    %106 = vmatpush1.msra.mxu0 %v49
    %107 = vmatprep.subr.mxu0 0.0
    %108 = vmatpush1.msra.mxu0 %v50
    %109 = vmatprep.subr.mxu0 0.0
    %110 = vmatpush1.msra.mxu0 %v51
    %111 = vmatprep.subr.mxu0 0.0
    %112 = vmatpush1.msra.mxu0 %v52
    %113 = vmatprep.subr.mxu0 0.0
    %114 = vmatpush1.msra.mxu0 %v53
    %115 = vmatprep.subr.mxu0 0.0
    %116 = vmatpush1.msra.mxu0 %v54
    %117 = vmatprep.subr.mxu0 0.0
    %118 = vmatpush1.msra.mxu0 %v55
    %119 = vmatprep.subr.mxu0 0.0
    %120 = vmatpush1.msra.mxu0 %v56
    %121 = vmatprep.subr.mxu0 0.0
    %122 = vmatpush1.msra.mxu0 %v57
    %123 = vmatprep.subr.mxu0 0.0
    %124 = vmatpush1.msra.mxu0 %v58
    %125 = vmatprep.subr.mxu0 0.0
    %126 = vmatpush1.msra.mxu0 %v59
    %127 = vmatprep.subr.mxu0 0.0
    %128 = vmatpush1.msra.mxu0 %v60
    %129 = vmatprep.subr.mxu0 0.0
    %130 = vmatpush1.msra.mxu0 %v61
    %131 = vmatprep.subr.mxu0 0.0
    %132 = vmatpush1.msra.mxu0 %v62
    %133 = vmatprep.subr.mxu0 0.0
    %134 = vmatpush1.msra.mxu0 %v63
    %135 = vmatprep.subr.mxu0 0.0
    %136 = vmatpush1.msra.mxu0 %v64
    %137 = vmatprep.subr.mxu0 0.0
    %138 = vmatpush1.msra.mxu0 %v65
    %139 = vmatprep.subr.mxu0 0.0
    %140 = vmatpush1.msra.mxu0 %v89
    %141 = vmatprep.subr.mxu0 0.0
    %142 = vmatpush1.msra.mxu0 0.0
    %143 = vmatprep.subr.mxu0 0.0
    %144 = vmatpush1.msra.mxu0 0.0
    %145 = vmatprep.subr.mxu0 0.0
    %146 = vmatpush1.msra.mxu0 0.0
    %147 = vmatprep.subr.mxu0 0.0
    %148 = vmatpush1.msra.mxu0 0.0
    %149 = vmatprep.subr.mxu0 0.0
    %150 = vmatpush1.msra.mxu0 0.0
    %151 = vmatprep.subr.mxu0 0.0
    %152 = vmatpush1.msra.mxu0 0.0
    %153 = vmatprep.subr.mxu0 0.0
    %154 = vmatpush1.msra.mxu0 0.0
    %155 = vmatprep.mubr.f32.mxu0 %v85
    %156 = vmatmul.mubr.f32.gmra.mrb[0].mxu0 %v81
    %v157 = vpop.f32.mrb[0].mxu0
    %v158 = vadd.f32 %v72, %v157
    %v159 = vpop.f32.mrb[0].mxu0
    %160 = vdwg.mxu0
    %v161 = vmax.f32 %v158, 0.0
    %v162 = vld [vmem:[%s3] sm:$0xff]
    %v163 = vld [vmem:[%s3 + $0x8] sm:$0xff]
    %v164 = vld [vmem:[%s3 + $0x10] sm:$0xff]
    %v165 = vld [vmem:[%s3 + $0x18] sm:$0xff]
    %v166 = vld [vmem:[%s3 + $0x20] sm:$0xff]
    %v167 = vld [vmem:[%s3 + $0x28] sm:$0xff]
    %v168 = vld [vmem:[%s3 + $0x30] sm:$0xff]
    %v169 = vld [vmem:[%s3 + $0x38] sm:$0xff]
    %v170 = vld [vmem:[%s3 + $0x40] sm:$0xff]
    %v171 = vld [vmem:[%s3 + $0x48] sm:$0xff]
    %v172 = vld [vmem:[%s3 + $0x50] sm:$0xff]
    %v173 = vld [vmem:[%s3 + $0x58] sm:$0xff]
    %v174 = vld [vmem:[%s3 + $0x60] sm:$0xff]
    %v175 = vld [vmem:[%s3 + $0x68] sm:$0xff]
    %v176 = vld [vmem:[%s3 + $0x70] sm:$0xff]
    %v177 = vld [vmem:[%s3 + $0x78] sm:$0xff]
    %v178 = vld [vmem:[%s4] sm:$0x1]
    %v180 = vlaneseq
    %v181 = vshrl.u32 %v180, 7
    %v182 = vsub.s32 0, %v181
    %v183 = vrot.slane %v178, %v182
    %185 = vmatprep.subr.mxu0 0.0
    %186 = vmatpush1.msra.mxu0 %v162
    %187 = vmatprep.subr.mxu0 0.0
    %188 = vmatpush1.msra.mxu0 %v163
    %189 = vmatprep.subr.mxu0 0.0
    %190 = vmatpush1.msra.mxu0 %v164
    %191 = vmatprep.subr.mxu0 0.0
    %192 = vmatpush1.msra.mxu0 %v165
    %193 = vmatprep.subr.mxu0 0.0
    %194 = vmatpush1.msra.mxu0 %v166
    %195 = vmatprep.subr.mxu0 0.0
    %196 = vmatpush1.msra.mxu0 %v167
    %197 = vmatprep.subr.mxu0 0.0
    %198 = vmatpush1.msra.mxu0 %v168
    %199 = vmatprep.subr.mxu0 0.0
    %200 = vmatpush1.msra.mxu0 %v169
    %201 = vmatprep.subr.mxu0 0.0
    %202 = vmatpush1.msra.mxu0 %v170
    %203 = vmatprep.subr.mxu0 0.0
    %204 = vmatpush1.msra.mxu0 %v171
    %205 = vmatprep.subr.mxu0 0.0
    %206 = vmatpush1.msra.mxu0 %v172
    %207 = vmatprep.subr.mxu0 0.0
    %208 = vmatpush1.msra.mxu0 %v173
    %209 = vmatprep.subr.mxu0 0.0
    %210 = vmatpush1.msra.mxu0 %v174
    %211 = vmatprep.subr.mxu0 0.0
    %212 = vmatpush1.msra.mxu0 %v175
    %213 = vmatprep.subr.mxu0 0.0
    %214 = vmatpush1.msra.mxu0 %v176
    %215 = vmatprep.subr.mxu0 0.0
    %216 = vmatpush1.msra.mxu0 %v177
    %217 = vmatprep.subr.mxu0 0.0
    %218 = vmatpush1.msra.mxu0 0.0
    %219 = vmatprep.subr.mxu0 0.0
    %220 = vmatpush1.msra.mxu0 0.0
    %221 = vmatprep.subr.mxu0 0.0
    %222 = vmatpush1.msra.mxu0 0.0
    %223 = vmatprep.subr.mxu0 0.0
    %224 = vmatpush1.msra.mxu0 0.0
    %225 = vmatprep.subr.mxu0 0.0
    %226 = vmatpush1.msra.mxu0 0.0
    %227 = vmatprep.subr.mxu0 0.0
    %228 = vmatpush1.msra.mxu0 0.0
    %229 = vmatprep.subr.mxu0 0.0
    %230 = vmatpush1.msra.mxu0 0.0
    %231 = vmatprep.subr.mxu0 0.0
    %232 = vmatpush1.msra.mxu0 0.0
    %233 = vmatprep.subr.mxu0 0.0
    %234 = vmatpush1.msra.mxu0 0.0
    %235 = vmatprep.subr.mxu0 0.0
    %236 = vmatpush1.msra.mxu0 0.0
    %237 = vmatprep.subr.mxu0 0.0
    %238 = vmatpush1.msra.mxu0 0.0
    %239 = vmatprep.subr.mxu0 0.0
    %240 = vmatpush1.msra.mxu0 0.0
    %241 = vmatprep.subr.mxu0 0.0
    %242 = vmatpush1.msra.mxu0 0.0
    %243 = vmatprep.subr.mxu0 0.0
    %244 = vmatpush1.msra.mxu0 0.0
    %245 = vmatprep.subr.mxu0 0.0
    %246 = vmatpush1.msra.mxu0 0.0
    %247 = vmatprep.subr.mxu0 0.0
    %248 = vmatpush1.msra.mxu0 0.0
    %249 = vmatprep.mubr.f32.mxu0 0.0
    %250 = vmatmul.mubr.f32.gmra.mrb[0].mxu0 %v161
    %v251 = vpop.f32.mrb[0].mxu0
    %v252 = vadd.f32 %v183, %v251
    %v253 = vpop.f32.mrb[0].mxu0
    %254 = vdwg.mxu0
    %v255 = vmax.f32 %v252, 0.0
    %v256 = vld [vmem:[%s5] sm:$0xff]
    %v257 = vld [vmem:[%s5 + $0x8] sm:$0xff]
    %v258 = vld [vmem:[%s5 + $0x10] sm:$0xff]
    %v259 = vld [vmem:[%s5 + $0x18] sm:$0xff]
    %v260 = vld [vmem:[%s5 + $0x20] sm:$0xff]
    %v261 = vld [vmem:[%s5 + $0x28] sm:$0xff]
    %v262 = vld [vmem:[%s5 + $0x30] sm:$0xff]
    %v263 = vld [vmem:[%s5 + $0x38] sm:$0xff]
    %v264 = vld [vmem:[%s5 + $0x40] sm:$0xff]
    %v265 = vld [vmem:[%s5 + $0x48] sm:$0xff]
    %v266 = vld [vmem:[%s5 + $0x50] sm:$0xff]
    %v267 = vld [vmem:[%s5 + $0x58] sm:$0xff]
    %v268 = vld [vmem:[%s5 + $0x60] sm:$0xff]
    %v269 = vld [vmem:[%s5 + $0x68] sm:$0xff]
    %v270 = vld [vmem:[%s5 + $0x70] sm:$0xff]
    %v271 = vld [vmem:[%s5 + $0x78] sm:$0xff]
    %v272 = vld [vmem:[%s6] sm:$0x1]
    %v274 = vlaneseq
    %v275 = vshrl.u32 %v274, 7
    %v276 = vsub.s32 0, %v275
    %v277 = vrot.slane %v272, %v276
    %279 = vmatprep.subr.mxu0 0.0
    %280 = vmatpush1.msra.mxu0 %v256
    %281 = vmatprep.subr.mxu0 0.0
    %282 = vmatpush1.msra.mxu0 %v257
    %283 = vmatprep.subr.mxu0 0.0
    %284 = vmatpush1.msra.mxu0 %v258
    %285 = vmatprep.subr.mxu0 0.0
    %286 = vmatpush1.msra.mxu0 %v259
    %287 = vmatprep.subr.mxu0 0.0
    %288 = vmatpush1.msra.mxu0 %v260
    %289 = vmatprep.subr.mxu0 0.0
    %290 = vmatpush1.msra.mxu0 %v261
    %291 = vmatprep.subr.mxu0 0.0
    %292 = vmatpush1.msra.mxu0 %v262
    %293 = vmatprep.subr.mxu0 0.0
    %294 = vmatpush1.msra.mxu0 %v263
    %295 = vmatprep.subr.mxu0 0.0
    %296 = vmatpush1.msra.mxu0 %v264
    %297 = vmatprep.subr.mxu0 0.0
    %298 = vmatpush1.msra.mxu0 %v265
    %299 = vmatprep.subr.mxu0 0.0
    %300 = vmatpush1.msra.mxu0 %v266
    %301 = vmatprep.subr.mxu0 0.0
    %302 = vmatpush1.msra.mxu0 %v267
    %303 = vmatprep.subr.mxu0 0.0
    %304 = vmatpush1.msra.mxu0 %v268
    %305 = vmatprep.subr.mxu0 0.0
    %306 = vmatpush1.msra.mxu0 %v269
    %307 = vmatprep.subr.mxu0 0.0
    %308 = vmatpush1.msra.mxu0 %v270
    %309 = vmatprep.subr.mxu0 0.0
    %310 = vmatpush1.msra.mxu0 %v271
    %311 = vmatprep.subr.mxu0 0.0
    %312 = vmatpush1.msra.mxu0 0.0
    %313 = vmatprep.subr.mxu0 0.0
    %314 = vmatpush1.msra.mxu0 0.0
    %315 = vmatprep.subr.mxu0 0.0
    %316 = vmatpush1.msra.mxu0 0.0
    %317 = vmatprep.subr.mxu0 0.0
    %318 = vmatpush1.msra.mxu0 0.0
    %319 = vmatprep.subr.mxu0 0.0
    %320 = vmatpush1.msra.mxu0 0.0
    %321 = vmatprep.subr.mxu0 0.0
    %322 = vmatpush1.msra.mxu0 0.0
    %323 = vmatprep.subr.mxu0 0.0
    %324 = vmatpush1.msra.mxu0 0.0
    %325 = vmatprep.subr.mxu0 0.0
    %326 = vmatpush1.msra.mxu0 0.0
    %327 = vmatprep.subr.mxu0 0.0
    %328 = vmatpush1.msra.mxu0 0.0
    %329 = vmatprep.subr.mxu0 0.0
    %330 = vmatpush1.msra.mxu0 0.0
    %331 = vmatprep.subr.mxu0 0.0
    %332 = vmatpush1.msra.mxu0 0.0
    %333 = vmatprep.subr.mxu0 0.0
    %334 = vmatpush1.msra.mxu0 0.0
    %335 = vmatprep.subr.mxu0 0.0
    %336 = vmatpush1.msra.mxu0 0.0
    %337 = vmatprep.subr.mxu0 0.0
    %338 = vmatpush1.msra.mxu0 0.0
    %339 = vmatprep.subr.mxu0 0.0
    %340 = vmatpush1.msra.mxu0 0.0
    %341 = vmatprep.subr.mxu0 0.0
    %342 = vmatpush1.msra.mxu0 0.0
    %343 = vmatprep.mubr.f32.mxu0 0.0
    %344 = vmatmul.mubr.f32.gmra.mrb[0].mxu0 %v255
    %v345 = vpop.f32.mrb[0].mxu0
    %v346 = vadd.f32 %v277, %v345
    %v347 = vpop.f32.mrb[0].mxu0
    %348 = vdwg.mxu0
    %vm349 = vcmask 58368
    %v350 = vsel %vm349, %v346, -inf
    %351 = vmax.xlane.f32.xlu0 %v350
    %v352 = vpop.xlane.xlu0 %351
    %v353 = vsub.f32 %v346, %v352
    %v354 = vmul.f32 %v353, 1.442695
    %v355 = vpow.pop %v354
    %v356 = vsel %vm349, %v355, 0.0
    %357 = vadd.xlane.f32.xlu0 %v356
    %v358 = vpop.xlane.xlu0 %357
    %v359 = vrcp.pop %v358
    %v360 = vmul.f32 %v355, %v359
    %361 = vst.msk [vmem:[#allocation5] sm:$0x3] %vm349, %v360
    // Predicated region
    $region34: #{tpu_custom_call.1} parent=1 // pred_check
      _
    $region35: #{tpu_custom_call.1} parent=1 // pred_check_branch
      %363 = sbr.rel (0) target = $region37
    $region36: #{tpu_custom_call.1} parent=1 // pred_region
      %s365 = ssub.s32 32, 32
      %366 = vsyncadd [#allocation4], %s365
      %s368 = sshll.u32 [#allocation5], 4
      %s369 = int_to_ptr.vmem [resolvable:$true] %s368
      %371 = dma.vmem_to_hbm [thread:$0]  %s369, 32, %s7, [#allocation4]
    $region37: #{tpu_custom_call.1} parent=1 // pred_fallthru
      _
    // Predicated region
    $region38: #{tpu_custom_call.1} parent=1 // pred_check
      _
    $region39: #{tpu_custom_call.1} parent=1 // pred_check_branch
      %373 = sbr.rel (0) target = $region41
    $region40: #{tpu_custom_call.1} parent=1 // pred_region
      %374 = dma.done [#allocation4], 32
    $region41: #{tpu_custom_call.1} parent=1 // pred_fallthru
      _
    %375 = vsyncpa [#allocation3], 1
    %376 = vsyncpa [#allocation4], 1

</llo_original>
